<compile_context>
chip_gen: v5e
topology: v5e:2x2
jax: 0.10.0
libtpu: 0.0.40
codegen_flags: <defaults>
</compile_context>

<pallas_src>
import math

import jax
import jax.numpy as jnp
from jax.experimental import pallas as pl
from jax.experimental.pallas import tpu as pltpu


_MAX_BLOCK_BYTES = 4 * 1024 * 1024    # per-block cap -> ~16 MiB double-buffered VMEM
_VMEM_LIMIT_BYTES = 32 * 1024 * 1024  # scoped-VMEM cap, portable on v5e/v6e/v7x
_MIN_SPLIT_BYTES = 2 * 1024 * 1024    # above this, force >=2 blocks (v7x has 2 TCs)


def _copy_kernel(x_ref, o_ref):
    # Pure pass-through of the current lane-dense VMEM tile.
    o_ref[...] = x_ref[...]


def _sublane_multiple(dtype):
    # 8 sublanes for 32-bit, 16 for 16-bit, 32 for 8-bit packed dtypes.
    itemsize = jnp.dtype(dtype).itemsize
    return max(8, 32 // max(1, itemsize))


def _choose_lane_width(n):
    # Widest lane-dense trailing dim (multiple of 128) dividing the element
    # count; wider trailing dims -> unmasked vst stores.  None -> pad to 128.
    for c in (2048, 1024, 512, 256, 128):
        if n % c == 0:
            return c
    return None


def _choose_row_tile(rows, row_bytes, sublane_mult):
    """Sublane-aligned row tile capped only by the block-byte budget.

    The tile does NOT need to divide `rows`; the grid uses cdiv and Pallas
    masks the ragged last block.
    """
    if rows <= sublane_mult:
        # Tiny: one full-extent block (legal — block dim equals array dim).
        return rows
    cap_rows = max(sublane_mult, _MAX_BLOCK_BYTES // max(1, row_bytes))
    tile = min(rows, cap_rows)
    tile = max(sublane_mult, (tile // sublane_mult) * sublane_mult)
    # v7x: large arrays must split into >=2 blocks so both TensorCores carry
    # HBM traffic.  No effect on v5e/v6e (single TC).
    if rows * row_bytes >= _MIN_SPLIT_BYTES and tile >= rows:
        half = (rows + 1) // 2
        half = ((half + sublane_mult - 1) // sublane_mult) * sublane_mult
        tile = min(tile, half)
    return tile


def _pallas_copy(prev_output):
    """Materialize a bit-exact copy of `prev_output` via a tiled Pallas kernel."""
    orig_shape = prev_output.shape
    dtype = prev_output.dtype
    n = int(math.prod(orig_shape)) if orig_shape else 1

    lanes = _choose_lane_width(n)
    pad = 0
    if lanes is None:
        # Awkward element count: pad the flat vector to a multiple of 128
        # lanes, tile normally, slice padding off afterward.  Avoids the
        # (1, n) single-block layout (8x sublane padding, no pipelining).
        lanes = 128
        n_padded = ((n + lanes - 1) // lanes) * lanes
        pad = n_padded - n
        flat = prev_output.reshape(n)
        if pad:
            flat = jnp.pad(flat, (0, pad))
        x2d = flat.reshape(n_padded // lanes, lanes)
    else:
        x2d = prev_output.reshape(n // lanes, lanes)

    rows = x2d.shape[0]
    row_bytes = lanes * jnp.dtype(dtype).itemsize
    tile = _choose_row_tile(rows, row_bytes, _sublane_multiple(dtype))
    grid = (pl.cdiv(rows, tile),)

    out2d = pl.pallas_call(
        _copy_kernel,
        out_shape=jax.ShapeDtypeStruct((rows, lanes), dtype),
        grid=grid,
        in_specs=[pl.BlockSpec((tile, lanes), lambda r: (r, 0))],
        out_specs=pl.BlockSpec((tile, lanes), lambda r: (r, 0)),
        compiler_params=pltpu.CompilerParams(
            dimension_semantics=("parallel",),   # shards across v7x's 2 TCs
            vmem_limit_bytes=_VMEM_LIMIT_BYTES,
        ),
    )(x2d)

    if pad:
        return out2d.reshape(rows * lanes)[:n].reshape(orig_shape)
    return out2d.reshape(orig_shape)


def decoder_forward(prev_output, encoder_out=None, use_kernel=False, **kwargs):
    """Base-Decoder 'forward': identity on prev_output.

    Default is the zero-copy path (return the input; 0 HBM bytes, 0 dispatch
    latency).  Pass `use_kernel=True` only if a materialized copy is
    explicitly required; that path costs 2N bytes of HBM bandwidth.
    encoder_out / kwargs are accepted to mirror the PyTorch signature but are
    unused, exactly as the abstract base class defines no use for them.
    """
    del encoder_out, kwargs
    if not use_kernel:
        return prev_output
    return _pallas_copy(prev_output)


class PallasDecoder:
    """Mirror of the PyTorch base Decoder: holds `dict`, identity forward."""

    def __init__(self, dictionary):
        self.dict = dictionary  # no parameters in the base class

    def __call__(self, prev_output, encoder_out=None, **kwargs):
        return decoder_forward(prev_output, encoder_out=encoder_out, **kwargs)


if __name__ == "__main__":
    key = jax.random.PRNGKey(0)
    decoder = PallasDecoder(dictionary={"pad": 0, "eos": 1, "unk": 2})

    # Primary small example consistent with the module: [batch, seq, hidden].
    B, S, H = 2, 8, 32
    prev_output = jax.random.normal(key, (B, S, H), dtype=jnp.float32)

    # Default (optimal) zero-copy path.
    out_fast = jax.block_until_ready(decoder(prev_output, encoder_out=None))
    assert out_fast.shape == (B, S, H) and out_fast.dtype == prev_output.dtype
    assert bool(jnp.allclose(out_fast, prev_output))

    # Explicit kernel path (exercises the Pallas copy once).
    out = jax.block_until_ready(
        decoder(prev_output, encoder_out=None, use_kernel=True))
    assert out.shape == (B, S, H) and out.dtype == prev_output.dtype
    assert bool(jnp.allclose(out, prev_output)), "identity pass-through mismatch"

    # Ragged-grid path: rows not a multiple of the tile (masked last block).
    key2 = jax.random.PRNGKey(1)
    ragged = jax.random.normal(key2, (4, 40, 128), dtype=jnp.float32)
    out_r = jax.block_until_ready(decoder(ragged, use_kernel=True))
    assert bool(jnp.allclose(out_r, ragged)), "ragged-tile pass-through mismatch"

    # Awkward element count (n % 128 != 0): pad-tile-slice path.
    key3 = jax.random.PRNGKey(2)
    odd = jax.random.normal(key3, (2, 3, 5), dtype=jnp.float32)
    out_odd = jax.block_until_ready(decoder(odd, use_kernel=True))
    assert out_odd.shape == odd.shape
    assert bool(jnp.allclose(out_odd, odd)), "padded pass-through mismatch"

    print("KERNEL_OK")
</pallas_src>

<mosaic_0001>
module attributes {stable_mosaic.version = 11 : i64} {
  func.func @_copy_kernel(%arg0: i32, %arg1: memref<1x512xf32, #tpu.memory_space<vmem>>, %arg2: memref<1x512xf32, #tpu.memory_space<vmem>>) attributes {dimension_semantics = [#tpu.dimension_semantics<parallel>], iteration_bounds = array<i64: 1>, scalar_prefetch = 0 : i64, scratch_operands = 0 : i64, tpu.core_type = #tpu.core_type<tc>, window_params = [{transform_indices = @transform_0, window_bounds = array<i64: 1, 512>}, {transform_indices = @transform_1, window_bounds = array<i64: 1, 512>}]} {
    %c0 = arith.constant 0 : index
    %c0_0 = arith.constant 0 : index
    %0 = vector.load %arg1[%c0, %c0_0] : memref<1x512xf32, #tpu.memory_space<vmem>>, vector<1x512xf32>
    %c0_1 = arith.constant 0 : index
    %c0_2 = arith.constant 0 : index
    %1 = vector.load %arg2[%c0_1, %c0_2] : memref<1x512xf32, #tpu.memory_space<vmem>>, vector<1x512xf32>
    tpu.vector_store %arg2[%c0_1, %c0_2], %0 {strides = array<i32>} : memref<1x512xf32, #tpu.memory_space<vmem>>, vector<1x512xf32>,
    return
  }
  func.func @transform_0(%arg0: i32) -> (i32, i32) {
    %c0_i32 = arith.constant 0 : i32
    %c0_i32_0 = arith.constant 0 : i32
    return %arg0, %c0_i32 : i32, i32
  }
  func.func @transform_1(%arg0: i32) -> (i32, i32) {
    %c0_i32 = arith.constant 0 : i32
    %c0_i32_0 = arith.constant 0 : i32
    return %arg0, %c0_i32 : i32, i32
  }
}

</mosaic_0001>

<llo_original>
// kernel: tpu_custom_call.1
$region0: #{tpu_custom_call.1}
  #allocation0 [shape = 'u32[]', space=smem, size = 0x4, offset = 0x4, fixed_abs, tag = 'smem constant byte address 0x4 - core index']
  #allocation1 [shape = 'u32[72,128]{1,0:T(1,128)}', space=vmem, size = 0x9000, scoped, tag = 'internal scratch']
  %s0 = inlined_call_operand.hbm [shape: f32[1,512], index: 0, kind: input, shape index: {}]
  %s1 = inlined_call_operand.hbm [shape: f32[1,512], index: 1, kind: output, shape index: {}]
  %s2 = sld [smem:[#allocation0]]
  $region18: #{tpu_custom_call.1} parent=0
    _
  %s4 = ssub.s32 1, %s2
  %s5 = scalar_select 0, %s4, %s2
  $region1: #{tpu_custom_call.1} parent=0
    #allocation2 [shape = 'u8[2048]{0}', space=vmem, size = 0x800, scoped, tag = 'input window, operand 0, single buffered']
    #allocation3 [shape = 's32[1]{0}', space=sflag, size = 0x4, scoped, tag = 'scoped memory for tpu_custom_call.1']
    #allocation4 [shape = 's32[1]{0}', space=sflag, size = 0x4, scoped, tag = 'scoped memory for tpu_custom_call.1']
    #allocation5 [shape = 'u8[2048]{0}', space=vmem, size = 0x800, scoped, tag = 'output window, operand 0, single buffered']
    %6 = vsyncpa [#allocation3], 0
    %7 = vsyncpa [#allocation4], 0
    // Predicated region
    $region2: #{tpu_custom_call.1} parent=1 // pred_check
      _
    $region3: #{tpu_custom_call.1} parent=1 // pred_check_branch
      %9 = sbr.rel (0) target = $region5
    $region4: #{tpu_custom_call.1} parent=1 // pred_region
      %11 = vsyncadd [#allocation3], 0
      %s13 = sshll.u32 %s0, 4
      %s14 = int_to_ptr.hbm [resolvable:$true] %s13
      %s15 = sshll.u32 [#allocation2], 4
      %s16 = int_to_ptr.vmem [resolvable:$true] %s15
      %18 = dma.hbm_to_vmem [thread:$0]  %s14, 64, %s16, [#allocation3]
    $region5: #{tpu_custom_call.1} parent=1 // pred_fallthru
      _
    // Predicated region
    $region6: #{tpu_custom_call.1} parent=1 // pred_check
      _
    $region7: #{tpu_custom_call.1} parent=1 // pred_check_branch
      %20 = sbr.rel (0) target = $region9
    $region8: #{tpu_custom_call.1} parent=1 // pred_region
      %22 = dma.done [#allocation3], 64
    $region9: #{tpu_custom_call.1} parent=1 // pred_fallthru
      _
    %v23 = vld [vmem:[#allocation2] sm:$0xf]
    %v24 = vlaneseq
    %vm25 = vcmp.ge.s32.totalorder %v24, 0
    %vm26 = vcmp.lt.s32.totalorder %v24, 512
    %vm27 = vmand %vm25, %vm26
    %28 = vst.msk [vmem:[#allocation5] sm:$0xf] %vm27, %v23
    // Predicated region
    $region10: #{tpu_custom_call.1} parent=1 // pred_check
      _
    $region11: #{tpu_custom_call.1} parent=1 // pred_check_branch
      %30 = sbr.rel (0) target = $region13
    $region12: #{tpu_custom_call.1} parent=1 // pred_region
      %32 = vsyncadd [#allocation4], 0
      %s34 = sshll.u32 [#allocation5], 4
      %s35 = int_to_ptr.vmem [resolvable:$true] %s34
      %s36 = sshll.u32 %s1, 4
      %s37 = int_to_ptr.hbm [resolvable:$true] %s36
      %39 = dma.vmem_to_hbm [thread:$0]  %s35, 64, %s37, [#allocation4]
    $region13: #{tpu_custom_call.1} parent=1 // pred_fallthru
      _
    // Predicated region
    $region14: #{tpu_custom_call.1} parent=1 // pred_check
      _
    $region15: #{tpu_custom_call.1} parent=1 // pred_check_branch
      %41 = sbr.rel (0) target = $region17
    $region16: #{tpu_custom_call.1} parent=1 // pred_region
      %43 = dma.done [#allocation4], 64
    $region17: #{tpu_custom_call.1} parent=1 // pred_fallthru
      _
    %44 = vsyncpa [#allocation3], 1
    %45 = vsyncpa [#allocation4], 1

</llo_original>
